<compile_context>
chip_gen: v5e
topology: v5e:2x2
jax: 0.10.0
libtpu: 0.0.40
codegen_flags: <defaults>
</compile_context>

<pallas_src>
import functools

import jax
import jax.numpy as jnp
from jax import lax
from jax.experimental import pallas as pl
from jax.experimental.pallas import tpu as pltpu

_LANE = 128
_VMEM_LIMIT_BYTES = 32 * 1024 * 1024     # safe scoped VMEM limit on v5e/v6e/v7x
_VMEM_BUDGET_BYTES = 28 * 1024 * 1024    # sizing headroom below that limit
_VMEM_TABLE_MAX_BYTES = 8 * 1024 * 1024  # table <= this -> keep it VMEM-resident


# --------------------------------------------------------------------------
# Shared helpers
# --------------------------------------------------------------------------
def _tile_loss_sum(logits, tgt, tile_start, n_valid):
    """Sum of per-token cross-entropy over one tile (padded rows masked)."""
    logits = logits.astype(jnp.float32)
    tn, v = logits.shape
    lane = lax.broadcasted_iota(jnp.int32, (tn, v), 1)
    m = jnp.max(logits, axis=-1, keepdims=True)
    shifted = logits - m                                    # reused by both sums
    lse_sh = jnp.log(jnp.sum(jnp.exp(shifted), axis=-1, keepdims=True))
    picked_sh = jnp.sum(jnp.where(lane == tgt, shifted, 0.0),
                        axis=-1, keepdims=True)
    losses = lse_sh - picked_sh                             # (tn, 1)
    row = tile_start + lax.broadcasted_iota(jnp.int32, (tn, 1), 0)
    losses = jnp.where(row < n_valid, losses, 0.0)
    return jnp.sum(losses, axis=0, keepdims=True)           # (1, 1)


def _vmem_gather(idx_ref, table_ref, dst_ref, tile_start, tn):
    """Gather `tn` rows of the VMEM-resident table via dynamic-slice reads."""
    for t in range(tn):                     # small static tile -> unrolled
        row = idx_ref[tile_start + t]
        dst_ref[pl.ds(t, 1), :] = table_ref[pl.ds(row, 1), :]


def _hbm_gather_start(idx_ref, table_hbm, rows_vmem, sems, tile_idx, slot, tn):
    """Issue the per-row HBM->VMEM DMAs for one tile into buffer `slot`."""
    base = tile_idx * tn
    for t in range(tn):
        row = idx_ref[base + t]
        pltpu.make_async_copy(
            table_hbm.at[pl.ds(row, 1), :],
            rows_vmem.at[slot, pl.ds(t, 1), :],
            sems.at[slot, t],
        ).start()


def _hbm_gather_wait(idx_ref, table_hbm, rows_vmem, sems, tile_idx, slot, tn):
    """Wait using descriptors identical to the matching _hbm_gather_start."""
    base = tile_idx * tn
    for t in range(tn):
        row = idx_ref[base + t]             # same row id -> same descriptor
        pltpu.make_async_copy(
            table_hbm.at[pl.ds(row, 1), :],
            rows_vmem.at[slot, pl.ds(t, 1), :],
            sems.at[slot, t],
        ).wait()


# --------------------------------------------------------------------------
# Kernels: VMEM-resident table (small vocab fast path)
# --------------------------------------------------------------------------
def _logits_kernel_vmem(idx_ref, table_ref, logits_ref):
    i = pl.program_id(0)
    tn = logits_ref.shape[0]
    _vmem_gather(idx_ref, table_ref, logits_ref, i * tn, tn)


def _loss_kernel_vmem(n_valid, idx_ref, tgt_ref, table_ref, logits_ref,
                      loss_ref, loss_acc):
    i = pl.program_id(0)
    tn = logits_ref.shape[0]

    @pl.when(i == 0)
    def _():
        loss_acc[...] = jnp.zeros_like(loss_acc)

    _vmem_gather(idx_ref, table_ref, logits_ref, i * tn, tn)
    loss_acc[...] += _tile_loss_sum(logits_ref[...], tgt_ref[...], i * tn,
                                    n_valid)

    @pl.when(i == pl.num_programs(0) - 1)
    def _():
        loss_ref[...] = loss_acc[...] * (1.0 / n_valid)


def _loss_only_kernel_vmem(n_valid, idx_ref, tgt_ref, table_ref, loss_ref,
                           rows_vmem, loss_acc):
    i = pl.program_id(0)
    tn = rows_vmem.shape[0]

    @pl.when(i == 0)
    def _():
        loss_acc[...] = jnp.zeros_like(loss_acc)

    _vmem_gather(idx_ref, table_ref, rows_vmem, i * tn, tn)
    loss_acc[...] += _tile_loss_sum(rows_vmem[...], tgt_ref[...], i * tn,
                                    n_valid)

    @pl.when(i == pl.num_programs(0) - 1)
    def _():
        loss_ref[...] = loss_acc[...] * (1.0 / n_valid)


# --------------------------------------------------------------------------
# Kernels: HBM table + cross-step double-buffered DMA gather (large vocab)
# --------------------------------------------------------------------------
def _logits_kernel_hbm(idx_ref, table_hbm, logits_ref, rows_vmem, sems):
    i = pl.program_id(0)
    n = pl.num_programs(0)
    tn = logits_ref.shape[0]
    slot = i % 2

    @pl.when(i == 0)
    def _():                                 # prime slot 0 with tile 0
        _hbm_gather_start(idx_ref, table_hbm, rows_vmem, sems, 0, 0, tn)

    @pl.when(i + 1 < n)
    def _():                                 # prefetch next tile (hidden)
        _hbm_gather_start(idx_ref, table_hbm, rows_vmem, sems, i + 1,
                          (i + 1) % 2, tn)

    _hbm_gather_wait(idx_ref, table_hbm, rows_vmem, sems, i, slot, tn)
    logits_ref[...] = rows_vmem[slot]


def _loss_kernel_hbm(n_valid, idx_ref, tgt_ref, table_hbm, logits_ref,
                     loss_ref, rows_vmem, sems, loss_acc):
    i = pl.program_id(0)
    n = pl.num_programs(0)
    tn = logits_ref.shape[0]
    slot = i % 2

    @pl.when(i == 0)
    def _():
        loss_acc[...] = jnp.zeros_like(loss_acc)
        _hbm_gather_start(idx_ref, table_hbm, rows_vmem, sems, 0, 0, tn)

    @pl.when(i + 1 < n)
    def _():
        _hbm_gather_start(idx_ref, table_hbm, rows_vmem, sems, i + 1,
                          (i + 1) % 2, tn)

    _hbm_gather_wait(idx_ref, table_hbm, rows_vmem, sems, i, slot, tn)
    logits = rows_vmem[slot]
    logits_ref[...] = logits
    loss_acc[...] += _tile_loss_sum(logits, tgt_ref[...], i * tn, n_valid)

    @pl.when(i == n - 1)
    def _():
        loss_ref[...] = loss_acc[...] * (1.0 / n_valid)


def _loss_only_kernel_hbm(n_valid, idx_ref, tgt_ref, table_hbm, loss_ref,
                          rows_vmem, sems, loss_acc):
    i = pl.program_id(0)
    n = pl.num_programs(0)
    tn = rows_vmem.shape[1]
    slot = i % 2

    @pl.when(i == 0)
    def _():
        loss_acc[...] = jnp.zeros_like(loss_acc)
        _hbm_gather_start(idx_ref, table_hbm, rows_vmem, sems, 0, 0, tn)

    @pl.when(i + 1 < n)
    def _():
        _hbm_gather_start(idx_ref, table_hbm, rows_vmem, sems, i + 1,
                          (i + 1) % 2, tn)

    _hbm_gather_wait(idx_ref, table_hbm, rows_vmem, sems, i, slot, tn)
    loss_acc[...] += _tile_loss_sum(rows_vmem[slot], tgt_ref[...], i * tn,
                                    n_valid)

    @pl.when(i == n - 1)
    def _():
        loss_ref[...] = loss_acc[...] * (1.0 / n_valid)


# --------------------------------------------------------------------------
# Wrapper
# --------------------------------------------------------------------------
def _pick_token_tile(n, v_pad, itemsize, table_in_vmem):
    """Largest token tile that keeps all buffers within the scoped-VMEM budget."""
    row_bytes = v_pad * itemsize
    if table_in_vmem:
        avail = _VMEM_BUDGET_BYTES - 2 * v_pad * row_bytes   # table (2x, safe)
        per_tok = 3 * row_bytes    # 2x pipelined logits block + rows scratch
        cap = 256                  # bound the unrolled in-kernel gather loop
    else:
        avail = _VMEM_BUDGET_BYTES
        per_tok = 4 * row_bytes    # 2x rows double-buffer + 2x logits block
        cap = 32                   # bound DMA descriptors / sems per grid step
    tn = (avail // per_tok) // 8 * 8
    tn = max(8, min(cap, tn))
    tn = min(tn, max(8, -(-n // 8) * 8))   # never bigger than (padded) N
    return int(tn)


def bigram_forward(idx, table, targets=None, *, return_logits=True,
                   token_tile=None, table_in_vmem=None):
    """Pallas equivalent of BigramLanguageModel.forward.

    idx:     (B, T) int token ids
    table:   (V, V) float embedding table (row i = logits for token i)
    targets: optional (B, T) int token ids
    Returns (logits (B, T, V) or None, loss scalar float32 or None).
    """
    B, T = idx.shape
    V = table.shape[0]
    N = B * T
    dtype = table.dtype
    itemsize = jnp.dtype(dtype).itemsize

    # Lane-align the vocab axis; padded columns get a huge negative value so
    # they contribute nothing to the log-sum-exp; padded rows are never read
    # by valid token ids.
    v_pad = -(-V // _LANE) * _LANE
    if v_pad != V:
        table = jnp.pad(table, ((0, 0), (0, v_pad - V)), constant_values=-1e30)
        table = jnp.pad(table, ((0, v_pad - V), (0, 0)))

    table_bytes = v_pad * v_pad * itemsize
    if table_in_vmem is None:
        table_in_vmem = table_bytes <= _VMEM_TABLE_MAX_BYTES

    tn = token_tile or _pick_token_tile(N, v_pad, itemsize, table_in_vmem)
    n_pad = -(-N // tn) * tn
    grid = (n_pad // tn,)

    idx_flat = idx.reshape(N).astype(jnp.int32)
    if n_pad != N:
        idx_flat = jnp.pad(idx_flat, (0, n_pad - N))

    if table_in_vmem:
        # DMA'd once, stays resident across grid steps (constant block index).
        table_spec = pl.BlockSpec((v_pad, v_pad), lambda i, ids: (0, 0))
    else:
        table_spec = pl.BlockSpec(memory_space=pl.ANY)    # stays in HBM
    logits_spec = pl.BlockSpec((tn, v_pad), lambda i, ids: (i, 0))
    hbm_scratch = [pltpu.VMEM((2, tn, v_pad), dtype),
                   pltpu.SemaphoreType.DMA((2, tn))]
    acc_scratch = pltpu.VMEM((1, 1), jnp.float32)

    def strip(logits):
        if n_pad != N or v_pad != V:
            logits = logits[:N, :V]
        return logits.reshape(B, T, V)

    # ---------------- logits-only path (targets is None) ----------------
    if targets is None:
        kernel = _logits_kernel_vmem if table_in_vmem else _logits_kernel_hbm
        # Cross-step manual DMA in the HBM path requires sequential execution.
        sem = ("parallel",) if table_in_vmem else ("arbitrary",)
        logits = pl.pallas_call(
            kernel,
            out_shape=jax.ShapeDtypeStruct((n_pad, v_pad), dtype),
            grid_spec=pltpu.PrefetchScalarGridSpec(
                num_scalar_prefetch=1,
                grid=grid,
                in_specs=[table_spec],
                out_specs=logits_spec,
                scratch_shapes=[] if table_in_vmem else hbm_scratch,
            ),
            compiler_params=pltpu.CompilerParams(
                dimension_semantics=sem,
                vmem_limit_bytes=_VMEM_LIMIT_BYTES),
        )(idx_flat, table)
        return strip(logits), None

    # ---------------- loss paths ----------------
    tgt_col = targets.reshape(N, 1).astype(jnp.int32)
    if n_pad != N:
        tgt_col = jnp.pad(tgt_col, ((0, n_pad - N), (0, 0)))
    tgt_spec = pl.BlockSpec((tn, 1), lambda i, ids: (i, 0))
    loss_spec = pl.BlockSpec((1, 1), lambda i, ids: (0, 0))
    params = pltpu.CompilerParams(
        dimension_semantics=("arbitrary",),     # loss reduction axis
        vmem_limit_bytes=_VMEM_LIMIT_BYTES)

    if return_logits:
        kernel = _loss_kernel_vmem if table_in_vmem else _loss_kernel_hbm
        scratch = ([acc_scratch] if table_in_vmem
                   else hbm_scratch + [acc_scratch])
        logits, loss = pl.pallas_call(
            functools.partial(kernel, N),
            out_shape=(jax.ShapeDtypeStruct((n_pad, v_pad), dtype),
                       jax.ShapeDtypeStruct((1, 1), jnp.float32)),
            grid_spec=pltpu.PrefetchScalarGridSpec(
                num_scalar_prefetch=1,
                grid=grid,
                in_specs=[tgt_spec, table_spec],
                out_specs=(logits_spec, loss_spec),
                scratch_shapes=scratch,
            ),
            compiler_params=params,
        )(idx_flat, tgt_col, table)
        return strip(logits), loss[0, 0]

    kernel = _loss_only_kernel_vmem if table_in_vmem else _loss_only_kernel_hbm
    scratch = ([pltpu.VMEM((tn, v_pad), dtype), acc_scratch] if table_in_vmem
               else hbm_scratch + [acc_scratch])
    loss = pl.pallas_call(
        functools.partial(kernel, N),
        out_shape=jax.ShapeDtypeStruct((1, 1), jnp.float32),
        grid_spec=pltpu.PrefetchScalarGridSpec(
            num_scalar_prefetch=1,
            grid=grid,
            in_specs=[tgt_spec, table_spec],
            out_specs=loss_spec,
            scratch_shapes=scratch,
        ),
        compiler_params=params,
    )(idx_flat, tgt_col, table)
    return None, loss[0, 0]


# --------------------------------------------------------------------------
# Reference + tests
# --------------------------------------------------------------------------
def _reference_forward(idx, table, targets=None):
    logits = table[idx].astype(jnp.float32)                      # (B, T, V)
    if targets is None:
        return logits, None
    B, T, V = logits.shape
    flat = logits.reshape(B * T, V)
    lse = jax.scipy.special.logsumexp(flat, axis=-1)
    picked = jnp.take_along_axis(flat, targets.reshape(B * T, 1), axis=-1)[:, 0]
    return logits, jnp.mean(lse - picked)


if __name__ == "__main__":
    B, T = 2, 8
    key = jax.random.PRNGKey(0)
    keys = jax.random.split(key, 2)

    def make_inputs(vocab, subkey):
        k_table, k_idx, k_tgt = jax.random.split(subkey, 3)
        # nn.Embedding default init: N(0, 1)
        table = jax.random.normal(k_table, (vocab, vocab), dtype=jnp.float32)
        idx = jax.random.randint(k_idx, (B, T), 0, vocab, dtype=jnp.int32)
        tgt = jax.random.randint(k_tgt, (B, T), 0, vocab, dtype=jnp.int32)
        return table, idx, tgt

    # Case 1: lane-aligned vocab -> VMEM-resident-table fast path.
    table, idx, tgt = make_inputs(128, keys[0])
    ref_logits, ref_loss = _reference_forward(idx, table, tgt)

    logits, loss = bigram_forward(idx, table, tgt)
    logits = jax.block_until_ready(logits)
    loss = jax.block_until_ready(loss)
    assert logits.shape == (B, T, 128)
    assert jnp.allclose(logits, ref_logits, atol=1e-5)
    assert jnp.allclose(loss, ref_loss, atol=1e-4)

    logits_only, loss_none = bigram_forward(idx, table, None)
    jax.block_until_ready(logits_only)
    assert loss_none is None
    assert jnp.allclose(logits_only, ref_logits, atol=1e-5)

    _, loss_only = bigram_forward(idx, table, tgt, return_logits=False)
    assert jnp.allclose(jax.block_until_ready(loss_only), ref_loss, atol=1e-4)

    # Case 2: same inputs forced through the HBM-table path with the
    # cross-step double-buffered DMA gather (token_tile=8 -> 2 grid steps so
    # priming + prefetch-next-tile are both exercised).
    logits_h, loss_h = bigram_forward(idx, table, tgt, token_tile=8,
                                      table_in_vmem=False)
    jax.block_until_ready(logits_h)
    assert jnp.allclose(logits_h, ref_logits, atol=1e-5)
    assert jnp.allclose(loss_h, ref_loss, atol=1e-4)

    logits_h2, _ = bigram_forward(idx, table, None, token_tile=8,
                                  table_in_vmem=False)
    assert jnp.allclose(jax.block_until_ready(logits_h2), ref_logits, atol=1e-5)

    _, loss_h_only = bigram_forward(idx, table, tgt, return_logits=False,
                                    token_tile=8, table_in_vmem=False)
    assert jnp.allclose(jax.block_until_ready(loss_h_only), ref_loss, atol=1e-4)

    # Case 3: non-lane-aligned vocab (classic char-level size) to exercise
    # padding + post-kernel strip.
    table65, idx65, tgt65 = make_inputs(65, keys[1])
    ref_logits65, ref_loss65 = _reference_forward(idx65, table65, tgt65)
    logits65, loss65 = bigram_forward(idx65, table65, tgt65)
    jax.block_until_ready(logits65)
    assert logits65.shape == (B, T, 65)
    assert jnp.allclose(logits65, ref_logits65, atol=1e-5)
    assert jnp.allclose(loss65, ref_loss65, atol=1e-4)

    print("KERNEL_OK")
</pallas_src>

<mosaic_0001>
module attributes {stable_mosaic.version = 11 : i64} {
  func.func @_loss_kernel_vmem(%arg0: i32, %arg1: memref<16xi32, #tpu.memory_space<smem>>, %arg2: memref<16x1xi32, #tpu.memory_space<vmem>>, %arg3: memref<128x128xf32, #tpu.memory_space<vmem>>, %arg4: memref<16x128xf32, #tpu.memory_space<vmem>>, %arg5: memref<1x1xf32, #tpu.memory_space<vmem>>, %arg6: memref<1x1xf32, #tpu.memory_space<vmem>>) attributes {dimension_semantics = [#tpu.dimension_semantics<arbitrary>], iteration_bounds = array<i64: 1>, scalar_prefetch = 1 : i64, scratch_operands = 1 : i64, tpu.core_type = #tpu.core_type<tc>, window_params = [{transform_indices = @transform_0, window_bounds = array<i64: 16, 1>}, {pipeline_mode = #tpu.pipeline_mode<synchronous>, transform_indices = @transform_1, window_bounds = array<i64: 128, 128>}, {transform_indices = @transform_2, window_bounds = array<i64: 16, 128>}, {pipeline_mode = #tpu.pipeline_mode<synchronous>, transform_indices = @transform_3, window_bounds = array<i64: 1, 1>}]} {
    %c0_i32 = arith.constant 0 : i32
    %0 = arith.cmpi eq, %arg0, %c0_i32 : i32
    %1 = arith.extui %0 : i1 to i32
    %c0_i32_0 = arith.constant 0 : i32
    %2 = arith.cmpi ne, %1, %c0_i32_0 : i32
    scf.if %2 {
      %cst_51 = arith.constant 0.000000e+00 : f32
      %134 = vector.broadcast %cst_51 : f32 to vector<1x1xf32>
      %c0_52 = arith.constant 0 : index
      %c0_53 = arith.constant 0 : index
      %135 = vector.load %arg6[%c0_52, %c0_53] : memref<1x1xf32, #tpu.memory_space<vmem>>, vector<1x1xf32>
      tpu.vector_store %arg6[%c0_52, %c0_53], %134 {strides = array<i32>} : memref<1x1xf32, #tpu.memory_space<vmem>>, vector<1x1xf32>,
    } else {
    }
    %c16_i32 = arith.constant 16 : i32
    %3 = arith.muli %arg0, %c16_i32 : i32
    %c0_i32_1 = arith.constant 0 : i32
    %4 = arith.addi %3, %c0_i32_1 : i32
    %5 = arith.index_cast %4 : i32 to index
    %6 = memref.load %arg1[%5] : memref<16xi32, #tpu.memory_space<smem>>
    %7 = arith.index_cast %6 : i32 to index
    %c0 = arith.constant 0 : index
    %8 = vector.load %arg3[%7, %c0] : memref<128x128xf32, #tpu.memory_space<vmem>>, vector<1x128xf32>
    %c0_2 = arith.constant 0 : index
    %c0_3 = arith.constant 0 : index
    %9 = vector.load %arg4[%c0_2, %c0_3] : memref<16x128xf32, #tpu.memory_space<vmem>>, vector<1x128xf32>
    tpu.vector_store %arg4[%c0_2, %c0_3], %8 {strides = array<i32>} : memref<16x128xf32, #tpu.memory_space<vmem>>, vector<1x128xf32>,
    %c1_i32 = arith.constant 1 : i32
    %10 = arith.addi %3, %c1_i32 : i32
    %11 = arith.index_cast %10 : i32 to index
    %12 = memref.load %arg1[%11] : memref<16xi32, #tpu.memory_space<smem>>
    %13 = arith.index_cast %12 : i32 to index
    %c0_4 = arith.constant 0 : index
    %14 = vector.load %arg3[%13, %c0_4] : memref<128x128xf32, #tpu.memory_space<vmem>>, vector<1x128xf32>
    %c1 = arith.constant 1 : index
    %c0_5 = arith.constant 0 : index
    %15 = vector.load %arg4[%c1, %c0_5] : memref<16x128xf32, #tpu.memory_space<vmem>>, vector<1x128xf32>
    tpu.vector_store %arg4[%c1, %c0_5], %14 {strides = array<i32>} : memref<16x128xf32, #tpu.memory_space<vmem>>, vector<1x128xf32>,
    %c2_i32 = arith.constant 2 : i32
    %16 = arith.addi %3, %c2_i32 : i32
    %17 = arith.index_cast %16 : i32 to index
    %18 = memref.load %arg1[%17] : memref<16xi32, #tpu.memory_space<smem>>
    %19 = arith.index_cast %18 : i32 to index
    %c0_6 = arith.constant 0 : index
    %20 = vector.load %arg3[%19, %c0_6] : memref<128x128xf32, #tpu.memory_space<vmem>>, vector<1x128xf32>
    %c2 = arith.constant 2 : index
    %c0_7 = arith.constant 0 : index
    %21 = vector.load %arg4[%c2, %c0_7] : memref<16x128xf32, #tpu.memory_space<vmem>>, vector<1x128xf32>
    tpu.vector_store %arg4[%c2, %c0_7], %20 {strides = array<i32>} : memref<16x128xf32, #tpu.memory_space<vmem>>, vector<1x128xf32>,
    %c3_i32 = arith.constant 3 : i32
    %22 = arith.addi %3, %c3_i32 : i32
    %23 = arith.index_cast %22 : i32 to index
    %24 = memref.load %arg1[%23] : memref<16xi32, #tpu.memory_space<smem>>
    %25 = arith.index_cast %24 : i32 to index
    %c0_8 = arith.constant 0 : index
    %26 = vector.load %arg3[%25, %c0_8] : memref<128x128xf32, #tpu.memory_space<vmem>>, vector<1x128xf32>
    %c3 = arith.constant 3 : index
    %c0_9 = arith.constant 0 : index
    %27 = vector.load %arg4[%c3, %c0_9] : memref<16x128xf32, #tpu.memory_space<vmem>>, vector<1x128xf32>
    tpu.vector_store %arg4[%c3, %c0_9], %26 {strides = array<i32>} : memref<16x128xf32, #tpu.memory_space<vmem>>, vector<1x128xf32>,
    %c4_i32 = arith.constant 4 : i32
    %28 = arith.addi %3, %c4_i32 : i32
    %29 = arith.index_cast %28 : i32 to index
    %30 = memref.load %arg1[%29] : memref<16xi32, #tpu.memory_space<smem>>
    %31 = arith.index_cast %30 : i32 to index
    %c0_10 = arith.constant 0 : index
    %32 = vector.load %arg3[%31, %c0_10] : memref<128x128xf32, #tpu.memory_space<vmem>>, vector<1x128xf32>
    %c4 = arith.constant 4 : index
    %c0_11 = arith.constant 0 : index
    %33 = vector.load %arg4[%c4, %c0_11] : memref<16x128xf32, #tpu.memory_space<vmem>>, vector<1x128xf32>
    tpu.vector_store %arg4[%c4, %c0_11], %32 {strides = array<i32>} : memref<16x128xf32, #tpu.memory_space<vmem>>, vector<1x128xf32>,
    %c5_i32 = arith.constant 5 : i32
    %34 = arith.addi %3, %c5_i32 : i32
    %35 = arith.index_cast %34 : i32 to index
    %36 = memref.load %arg1[%35] : memref<16xi32, #tpu.memory_space<smem>>
    %37 = arith.index_cast %36 : i32 to index
    %c0_12 = arith.constant 0 : index
    %38 = vector.load %arg3[%37, %c0_12] : memref<128x128xf32, #tpu.memory_space<vmem>>, vector<1x128xf32>
    %c5 = arith.constant 5 : index
    %c0_13 = arith.constant 0 : index
    %39 = vector.load %arg4[%c5, %c0_13] : memref<16x128xf32, #tpu.memory_space<vmem>>, vector<1x128xf32>
    tpu.vector_store %arg4[%c5, %c0_13], %38 {strides = array<i32>} : memref<16x128xf32, #tpu.memory_space<vmem>>, vector<1x128xf32>,
    %c6_i32 = arith.constant 6 : i32
    %40 = arith.addi %3, %c6_i32 : i32
    %41 = arith.index_cast %40 : i32 to index
    %42 = memref.load %arg1[%41] : memref<16xi32, #tpu.memory_space<smem>>
    %43 = arith.index_cast %42 : i32 to index
    %c0_14 = arith.constant 0 : index
    %44 = vector.load %arg3[%43, %c0_14] : memref<128x128xf32, #tpu.memory_space<vmem>>, vector<1x128xf32>
    %c6 = arith.constant 6 : index
    %c0_15 = arith.constant 0 : index
    %45 = vector.load %arg4[%c6, %c0_15] : memref<16x128xf32, #tpu.memory_space<vmem>>, vector<1x128xf32>
    tpu.vector_store %arg4[%c6, %c0_15], %44 {strides = array<i32>} : memref<16x128xf32, #tpu.memory_space<vmem>>, vector<1x128xf32>,
    %c7_i32 = arith.constant 7 : i32
    %46 = arith.addi %3, %c7_i32 : i32
    %47 = arith.index_cast %46 : i32 to index
    %48 = memref.load %arg1[%47] : memref<16xi32, #tpu.memory_space<smem>>
    %49 = arith.index_cast %48 : i32 to index
    %c0_16 = arith.constant 0 : index
    %50 = vector.load %arg3[%49, %c0_16] : memref<128x128xf32, #tpu.memory_space<vmem>>, vector<1x128xf32>
    %c7 = arith.constant 7 : index
    %c0_17 = arith.constant 0 : index
    %51 = vector.load %arg4[%c7, %c0_17] : memref<16x128xf32, #tpu.memory_space<vmem>>, vector<1x128xf32>
    tpu.vector_store %arg4[%c7, %c0_17], %50 {strides = array<i32>} : memref<16x128xf32, #tpu.memory_space<vmem>>, vector<1x128xf32>,
    %c8_i32 = arith.constant 8 : i32
    %52 = arith.addi %3, %c8_i32 : i32
    %53 = arith.index_cast %52 : i32 to index
    %54 = memref.load %arg1[%53] : memref<16xi32, #tpu.memory_space<smem>>
    %55 = arith.index_cast %54 : i32 to index
    %c0_18 = arith.constant 0 : index
    %56 = vector.load %arg3[%55, %c0_18] : memref<128x128xf32, #tpu.memory_space<vmem>>, vector<1x128xf32>
    %c8 = arith.constant 8 : index
    %c0_19 = arith.constant 0 : index
    %57 = vector.load %arg4[%c8, %c0_19] : memref<16x128xf32, #tpu.memory_space<vmem>>, vector<1x128xf32>
    tpu.vector_store %arg4[%c8, %c0_19], %56 {strides = array<i32>} : memref<16x128xf32, #tpu.memory_space<vmem>>, vector<1x128xf32>,
    %c9_i32 = arith.constant 9 : i32
    %58 = arith.addi %3, %c9_i32 : i32
    %59 = arith.index_cast %58 : i32 to index
    %60 = memref.load %arg1[%59] : memref<16xi32, #tpu.memory_space<smem>>
    %61 = arith.index_cast %60 : i32 to index
    %c0_20 = arith.constant 0 : index
    %62 = vector.load %arg3[%61, %c0_20] : memref<128x128xf32, #tpu.memory_space<vmem>>, vector<1x128xf32>
    %c9 = arith.constant 9 : index
    %c0_21 = arith.constant 0 : index
    %63 = vector.load %arg4[%c9, %c0_21] : memref<16x128xf32, #tpu.memory_space<vmem>>, vector<1x128xf32>
    tpu.vector_store %arg4[%c9, %c0_21], %62 {strides = array<i32>} : memref<16x128xf32, #tpu.memory_space<vmem>>, vector<1x128xf32>,
    %c10_i32 = arith.constant 10 : i32
    %64 = arith.addi %3, %c10_i32 : i32
    %65 = arith.index_cast %64 : i32 to index
    %66 = memref.load %arg1[%65] : memref<16xi32, #tpu.memory_space<smem>>
    %67 = arith.index_cast %66 : i32 to index
    %c0_22 = arith.constant 0 : index
    %68 = vector.load %arg3[%67, %c0_22] : memref<128x128xf32, #tpu.memory_space<vmem>>, vector<1x128xf32>
    %c10 = arith.constant 10 : index
    %c0_23 = arith.constant 0 : index
    %69 = vector.load %arg4[%c10, %c0_23] : memref<16x128xf32, #tpu.memory_space<vmem>>, vector<1x128xf32>
    tpu.vector_store %arg4[%c10, %c0_23], %68 {strides = array<i32>} : memref<16x128xf32, #tpu.memory_space<vmem>>, vector<1x128xf32>,
    %c11_i32 = arith.constant 11 : i32
    %70 = arith.addi %3, %c11_i32 : i32
    %71 = arith.index_cast %70 : i32 to index
    %72 = memref.load %arg1[%71] : memref<16xi32, #tpu.memory_space<smem>>
    %73 = arith.index_cast %72 : i32 to index
    %c0_24 = arith.constant 0 : index
    %74 = vector.load %arg3[%73, %c0_24] : memref<128x128xf32, #tpu.memory_space<vmem>>, vector<1x128xf32>
    %c11 = arith.constant 11 : index
    %c0_25 = arith.constant 0 : index
    %75 = vector.load %arg4[%c11, %c0_25] : memref<16x128xf32, #tpu.memory_space<vmem>>, vector<1x128xf32>
    tpu.vector_store %arg4[%c11, %c0_25], %74 {strides = array<i32>} : memref<16x128xf32, #tpu.memory_space<vmem>>, vector<1x128xf32>,
    %c12_i32 = arith.constant 12 : i32
    %76 = arith.addi %3, %c12_i32 : i32
    %77 = arith.index_cast %76 : i32 to index
    %78 = memref.load %arg1[%77] : memref<16xi32, #tpu.memory_space<smem>>
    %79 = arith.index_cast %78 : i32 to index
    %c0_26 = arith.constant 0 : index
    %80 = vector.load %arg3[%79, %c0_26] : memref<128x128xf32, #tpu.memory_space<vmem>>, vector<1x128xf32>
    %c12 = arith.constant 12 : index
    %c0_27 = arith.constant 0 : index
    %81 = vector.load %arg4[%c12, %c0_27] : memref<16x128xf32, #tpu.memory_space<vmem>>, vector<1x128xf32>
    tpu.vector_store %arg4[%c12, %c0_27], %80 {strides = array<i32>} : memref<16x128xf32, #tpu.memory_space<vmem>>, vector<1x128xf32>,
    %c13_i32 = arith.constant 13 : i32
    %82 = arith.addi %3, %c13_i32 : i32
    %83 = arith.index_cast %82 : i32 to index
    %84 = memref.load %arg1[%83] : memref<16xi32, #tpu.memory_space<smem>>
    %85 = arith.index_cast %84 : i32 to index
    %c0_28 = arith.constant 0 : index
    %86 = vector.load %arg3[%85, %c0_28] : memref<128x128xf32, #tpu.memory_space<vmem>>, vector<1x128xf32>
    %c13 = arith.constant 13 : index
    %c0_29 = arith.constant 0 : index
    %87 = vector.load %arg4[%c13, %c0_29] : memref<16x128xf32, #tpu.memory_space<vmem>>, vector<1x128xf32>
    tpu.vector_store %arg4[%c13, %c0_29], %86 {strides = array<i32>} : memref<16x128xf32, #tpu.memory_space<vmem>>, vector<1x128xf32>,
    %c14_i32 = arith.constant 14 : i32
    %88 = arith.addi %3, %c14_i32 : i32
    %89 = arith.index_cast %88 : i32 to index
    %90 = memref.load %arg1[%89] : memref<16xi32, #tpu.memory_space<smem>>
    %91 = arith.index_cast %90 : i32 to index
    %c0_30 = arith.constant 0 : index
    %92 = vector.load %arg3[%91, %c0_30] : memref<128x128xf32, #tpu.memory_space<vmem>>, vector<1x128xf32>
    %c14 = arith.constant 14 : index
    %c0_31 = arith.constant 0 : index
    %93 = vector.load %arg4[%c14, %c0_31] : memref<16x128xf32, #tpu.memory_space<vmem>>, vector<1x128xf32>
    tpu.vector_store %arg4[%c14, %c0_31], %92 {strides = array<i32>} : memref<16x128xf32, #tpu.memory_space<vmem>>, vector<1x128xf32>,
    %c15_i32 = arith.constant 15 : i32
    %94 = arith.addi %3, %c15_i32 : i32
    %95 = arith.index_cast %94 : i32 to index
    %96 = memref.load %arg1[%95] : memref<16xi32, #tpu.memory_space<smem>>
    %97 = arith.index_cast %96 : i32 to index
    %c0_32 = arith.constant 0 : index
    %98 = vector.load %arg3[%97, %c0_32] : memref<128x128xf32, #tpu.memory_space<vmem>>, vector<1x128xf32>
    %c15 = arith.constant 15 : index
    %c0_33 = arith.constant 0 : index
    %99 = vector.load %arg4[%c15, %c0_33] : memref<16x128xf32, #tpu.memory_space<vmem>>, vector<1x128xf32>
    tpu.vector_store %arg4[%c15, %c0_33], %98 {strides = array<i32>} : memref<16x128xf32, #tpu.memory_space<vmem>>, vector<1x128xf32>,
    %c0_34 = arith.constant 0 : index
    %c0_35 = arith.constant 0 : index
    %100 = vector.load %arg6[%c0_34, %c0_35] : memref<1x1xf32, #tpu.memory_space<vmem>>, vector<1x1xf32>
    %c0_36 = arith.constant 0 : index
    %c0_37 = arith.constant 0 : index
    %101 = vector.load %arg4[%c0_36, %c0_37] : memref<16x128xf32, #tpu.memory_space<vmem>>, vector<16x128xf32>
    %c0_38 = arith.constant 0 : index
    %c0_39 = arith.constant 0 : index
    %102 = vector.load %arg2[%c0_38, %c0_39] : memref<16x1xi32, #tpu.memory_space<vmem>>, vector<16x1xi32>
    %c16_i32_40 = arith.constant 16 : i32
    %103 = arith.muli %arg0, %c16_i32_40 : i32
    %104 = tpu.iota {dimensions = array<i32: 1>} : vector<16x128xi32>
    %cst = arith.constant dense<0xFF800000> : vector<16xf32>
    %105 = vector.multi_reduction <maximumf>, %101, %cst [1] : vector<16x128xf32> to vector<16xf32>
    %106 = vector.shape_cast %105 : vector<16xf32> to vector<16x1xf32>
    %107 = vector.broadcast %106 : vector<16x1xf32> to vector<16x128xf32>
    %108 = arith.subf %101, %107 : vector<16x128xf32>
    %109 = math.exp %108 : vector<16x128xf32>
    %cst_41 = arith.constant dense<0.000000e+00> : vector<16xf32>
    %110 = vector.multi_reduction <add>, %109, %cst_41 [1] : vector<16x128xf32> to vector<16xf32>
    %111 = vector.shape_cast %110 : vector<16xf32> to vector<16x1xf32>
    %112 = math.log %111 : vector<16x1xf32>
    %113 = vector.broadcast %102 : vector<16x1xi32> to vector<16x128xi32>
    %114 = arith.cmpi eq, %104, %113 : vector<16x128xi32>
    %cst_42 = arith.constant 0.000000e+00 : f32
    %115 = vector.broadcast %cst_42 : f32 to vector<16x128xf32>
    %116 = arith.select %114, %108, %115 : vector<16x128xi1>, vector<16x128xf32>
    %cst_43 = arith.constant dense<0.000000e+00> : vector<16xf32>
    %117 = vector.multi_reduction <add>, %116, %cst_43 [1] : vector<16x128xf32> to vector<16xf32>
    %118 = vector.shape_cast %117 : vector<16xf32> to vector<16x1xf32>
    %119 = arith.subf %112, %118 : vector<16x1xf32>
    %120 = tpu.iota {dimensions = array<i32: 0>} : vector<16x1xi32>
    %121 = vector.broadcast %103 : i32 to vector<16x1xi32>
    %122 = arith.addi %121, %120 : vector<16x1xi32>
    %c16_i32_44 = arith.constant 16 : i32
    %123 = vector.broadcast %c16_i32_44 : i32 to vector<16x1xi32>
    %124 = arith.cmpi slt, %122, %123 : vector<16x1xi32>
    %cst_45 = arith.constant 0.000000e+00 : f32
    %125 = vector.broadcast %cst_45 : f32 to vector<16x1xf32>
    %126 = arith.select %124, %119, %125 : vector<16x1xi1>, vector<16x1xf32>
    %cst_46 = arith.constant dense<0.000000e+00> : vector<1xf32>
    %127 = vector.multi_reduction <add>, %126, %cst_46 [0] : vector<16x1xf32> to vector<1xf32>
    %128 = vector.shape_cast %127 : vector<1xf32> to vector<1x1xf32>
    %129 = arith.addf %100, %128 : vector<1x1xf32>
    %c0_47 = arith.constant 0 : index
    %c0_48 = arith.constant 0 : index
    %130 = vector.load %arg6[%c0_47, %c0_48] : memref<1x1xf32, #tpu.memory_space<vmem>>, vector<1x1xf32>
    tpu.vector_store %arg6[%c0_47, %c0_48], %129 {strides = array<i32>} : memref<1x1xf32, #tpu.memory_space<vmem>>, vector<1x1xf32>,
    %c0_i32_49 = arith.constant 0 : i32
    %131 = arith.cmpi eq, %arg0, %c0_i32_49 : i32
    %132 = arith.extui %131 : i1 to i32
    %c0_i32_50 = arith.constant 0 : i32
    %133 = arith.cmpi ne, %132, %c0_i32_50 : i32
    scf.if %133 {
      %c0_51 = arith.constant 0 : index
      %c0_52 = arith.constant 0 : index
      %134 = vector.load %arg6[%c0_51, %c0_52] : memref<1x1xf32, #tpu.memory_space<vmem>>, vector<1x1xf32>
      %cst_53 = arith.constant 6.250000e-02 : f32
      %135 = vector.broadcast %cst_53 : f32 to vector<1x1xf32>
      %136 = arith.mulf %134, %135 : vector<1x1xf32>
      %c0_54 = arith.constant 0 : index
      %c0_55 = arith.constant 0 : index
      %137 = vector.load %arg5[%c0_54, %c0_55] : memref<1x1xf32, #tpu.memory_space<vmem>>, vector<1x1xf32>
      tpu.vector_store %arg5[%c0_54, %c0_55], %136 {strides = array<i32>} : memref<1x1xf32, #tpu.memory_space<vmem>>, vector<1x1xf32>,
    } else {
    }
    return
  }
  func.func @transform_0(%arg0: i32, %arg1: memref<16xi32, #tpu.memory_space<smem>>) -> (i32, i32) {
    %c0_i32 = arith.constant 0 : i32
    %c0_i32_0 = arith.constant 0 : i32
    return %arg0, %c0_i32 : i32, i32
  }
  func.func @transform_1(%arg0: i32, %arg1: memref<16xi32, #tpu.memory_space<smem>>) -> (i32, i32) {
    %c0_i32 = arith.constant 0 : i32
    %c0_i32_0 = arith.constant 0 : i32
    %c0_i32_1 = arith.constant 0 : i32
    return %c0_i32, %c0_i32_0 : i32, i32
  }
  func.func @transform_2(%arg0: i32, %arg1: memref<16xi32, #tpu.memory_space<smem>>) -> (i32, i32) {
    %c0_i32 = arith.constant 0 : i32
    %c0_i32_0 = arith.constant 0 : i32
    return %arg0, %c0_i32 : i32, i32
  }
  func.func @transform_3(%arg0: i32, %arg1: memref<16xi32, #tpu.memory_space<smem>>) -> (i32, i32) {
    %c0_i32 = arith.constant 0 : i32
    %c0_i32_0 = arith.constant 0 : i32
    %c0_i32_1 = arith.constant 0 : i32
    return %c0_i32, %c0_i32_0 : i32, i32
  }
}

</mosaic_0001>

<llo_original>
// kernel: tpu_custom_call.1
$region0: #{tpu_custom_call.1}
  #allocation0 [shape = 'u32[]', space=smem, size = 0x4, offset = 0x4, fixed_abs, tag = 'smem constant byte address 0x4 - core index']
  #allocation1 [shape = 'u32[72,128]{1,0:T(1,128)}', space=vmem, size = 0x9000, scoped, tag = 'internal scratch']
  #allocation2 [shape = 'f32[1,1]{1,0:T(1,128)}', space=vmem, size = 0x200, scoped, tag = 'scratch operand']
  #allocation3 [shape = 's32[1]{0}', space=sflag, size = 0x4, scoped, tag = 'scoped memory for tpu_custom_call.1']
  #allocation4 [shape = 'u8[512]{0}', space=smem, size = 0x200, scoped, tag = 'prefetched SMEM operand 0']
  %s0 = inlined_call_operand.vmem [shape: s32[16], index: 0, kind: input, shape index: {}]
  %s1 = inlined_call_operand.vmem [shape: s32[16,1], index: 1, kind: input, shape index: {}]
  %s2 = inlined_call_operand.hbm [shape: f32[128,128], index: 2, kind: input, shape index: {}]
  %s3 = inlined_call_operand.hbm [shape: f32[16,128], index: 3, kind: output, shape index: {0}]
  %s4 = inlined_call_operand.hbm [shape: f32[1,1], index: 4, kind: output, shape index: {1}]
  %5 = xla_tuple %s3, %s4
  %s6 = sld [smem:[#allocation0]]
  $region38: #{tpu_custom_call.1} parent=0
    _
  %s8 = ssub.s32 1, %s6
  %s9 = scalar_select 0, %s8, %s6
  %s11 = sshll.u32 %s0, 4
  %s12 = int_to_ptr.vmem [resolvable:$true] %s11
  %14 = dma.vmem_to_smem %s12, 16, [#allocation4], [#allocation3]
  %16 = dma.done [#allocation3], 16
  %17 = sfence
  $region1: #{tpu_custom_call.1} parent=0
    #allocation5 [shape = 'u8[65536]{0}', space=vmem, size = 0x10000, scoped, tag = 'input window, operand 2, single buffered']
    #allocation6 [shape = 's32[1]{0}', space=sflag, size = 0x4, scoped, tag = 'scoped memory for tpu_custom_call.1']
    #allocation7 [shape = 's32[1]{0}', space=sflag, size = 0x4, scoped, tag = 'scoped memory for tpu_custom_call.1']
    #allocation8 [shape = 'u8[8192]{0}', space=vmem, size = 0x2000, scoped, tag = 'output window, operand 0, single buffered']
    #allocation9 [shape = 'u8[512]{0}', space=vmem, size = 0x400, scoped, tag = 'output window, operand 1, single buffered']
    #allocation10 [shape = 's32[1]{0}', space=sflag, size = 0x4, scoped, tag = 'scoped memory for tpu_custom_call.1']
    %18 = vsyncpa [#allocation6], 0
    %19 = vsyncpa [#allocation7], 0
    %20 = vsyncpa [#allocation10], 0
    // Predicated region
    $region2: #{tpu_custom_call.1} parent=1 // pred_check
      _
    $region3: #{tpu_custom_call.1} parent=1 // pred_check_branch
      %22 = sbr.rel (0) target = $region5
    $region4: #{tpu_custom_call.1} parent=1 // pred_region
      _
    $region5: #{tpu_custom_call.1} parent=1 // pred_fallthru
      _
    // Predicated region
    $region6: #{tpu_custom_call.1} parent=1 // pred_check
      _
    $region7: #{tpu_custom_call.1} parent=1 // pred_check_branch
      %24 = sbr.rel (0) target = $region9
    $region8: #{tpu_custom_call.1} parent=1 // pred_region
      %26 = vsyncadd [#allocation6], 0
      %s27 = sshll.u32 %s2, 4
      %s28 = int_to_ptr.hbm [resolvable:$true] %s27
      %s29 = sshll.u32 [#allocation5], 4
      %s30 = int_to_ptr.vmem [resolvable:$true] %s29
      %35 = dma.hbm_to_vmem [thread:$0]  %s28, 2048, %s30, [#allocation6], 128, 128, 8
    $region9: #{tpu_custom_call.1} parent=1 // pred_fallthru
      _
    // Predicated region
    $region10: #{tpu_custom_call.1} parent=1 // pred_check
      _
    $region11: #{tpu_custom_call.1} parent=1 // pred_check_branch
      %37 = sbr.rel (0) target = $region13
    $region12: #{tpu_custom_call.1} parent=1 // pred_region
      %39 = dma.done [#allocation6], 2048
    $region13: #{tpu_custom_call.1} parent=1 // pred_fallthru
      _
    %p40 = scmp.eq.s32.totalorder 0, 0
    // Predicated region
    $region14: #{tpu_custom_call.1} parent=1 // pred_check
      %p41 = pneg %p40
    $region15: #{tpu_custom_call.1} parent=1 // pred_check_branch
      %43 = sbr.rel (%p41) target = $region17
    $region16: #{tpu_custom_call.1} parent=1 // pred_region
      %vm44 = vcmask 0
      %45 = vst.msk [vmem:[#allocation2] sm:$0x1] %vm44, 0.0
    $region17: #{tpu_custom_call.1} parent=1 // pred_fallthru
      _
    %s46 = smul.u32 0, 16
    %s47 = sld [smem:[#allocation4 + %s46]]
    %s48 = scalar_lea.vmem [#allocation5], %s47
    %v49 = vld [vmem:[%s48] sm:$0x1]
    %50 = vst [vmem:[#allocation8] sm:$0x1] %v49
    %s51 = sadd.s32 %s46, 1
    %s52 = sld [smem:[#allocation4 + %s51]]
    %s53 = scalar_lea.vmem [#allocation5], %s52
    %v54 = vld [vmem:[%s53] sm:$0x1]
    %55 = vst [vmem:[#allocation8 + $0x1] sm:$0x1] %v54
    %s56 = sadd.s32 %s46, 2
    %s57 = sld [smem:[#allocation4 + %s56]]
    %s58 = scalar_lea.vmem [#allocation5], %s57
    %v59 = vld [vmem:[%s58] sm:$0x1]
    %60 = vst [vmem:[#allocation8 + $0x2] sm:$0x1] %v59
    %s61 = sadd.s32 %s46, 3
    %s62 = sld [smem:[#allocation4 + %s61]]
    %s63 = scalar_lea.vmem [#allocation5], %s62
    %v64 = vld [vmem:[%s63] sm:$0x1]
    %65 = vst [vmem:[#allocation8 + $0x3] sm:$0x1] %v64
    %s66 = sadd.s32 %s46, 4
    %s67 = sld [smem:[#allocation4 + %s66]]
    %s68 = scalar_lea.vmem [#allocation5], %s67
    %v69 = vld [vmem:[%s68] sm:$0x1]
    %70 = vst [vmem:[#allocation8 + $0x4] sm:$0x1] %v69
    %s71 = sadd.s32 %s46, 5
    %s72 = sld [smem:[#allocation4 + %s71]]
    %s73 = scalar_lea.vmem [#allocation5], %s72
    %v74 = vld [vmem:[%s73] sm:$0x1]
    %75 = vst [vmem:[#allocation8 + $0x5] sm:$0x1] %v74
    %s76 = sadd.s32 %s46, 6
    %s77 = sld [smem:[#allocation4 + %s76]]
    %s78 = scalar_lea.vmem [#allocation5], %s77
    %v79 = vld [vmem:[%s78] sm:$0x1]
    %80 = vst [vmem:[#allocation8 + $0x6] sm:$0x1] %v79
    %s81 = sadd.s32 %s46, 7
    %s82 = sld [smem:[#allocation4 + %s81]]
    %s83 = scalar_lea.vmem [#allocation5], %s82
    %v84 = vld [vmem:[%s83] sm:$0x1]
    %85 = vst [vmem:[#allocation8 + $0x7] sm:$0x1] %v84
    %s86 = sadd.s32 %s46, 8
    %s87 = sld [smem:[#allocation4 + %s86]]
    %s88 = scalar_lea.vmem [#allocation5], %s87
    %v89 = vld [vmem:[%s88] sm:$0x1]
    %90 = vst [vmem:[#allocation8 + $0x8] sm:$0x1] %v89
    %s91 = sadd.s32 %s46, 9
    %s92 = sld [smem:[#allocation4 + %s91]]
    %s93 = scalar_lea.vmem [#allocation5], %s92
    %v94 = vld [vmem:[%s93] sm:$0x1]
    %95 = vst [vmem:[#allocation8 + $0x9] sm:$0x1] %v94
    %s96 = sadd.s32 %s46, 10
    %s97 = sld [smem:[#allocation4 + %s96]]
    %s98 = scalar_lea.vmem [#allocation5], %s97
    %v99 = vld [vmem:[%s98] sm:$0x1]
    %100 = vst [vmem:[#allocation8 + $0xa] sm:$0x1] %v99
    %s101 = sadd.s32 %s46, 11
    %s102 = sld [smem:[#allocation4 + %s101]]
    %s103 = scalar_lea.vmem [#allocation5], %s102
    %v104 = vld [vmem:[%s103] sm:$0x1]
    %105 = vst [vmem:[#allocation8 + $0xb] sm:$0x1] %v104
    %s106 = sadd.s32 %s46, 12
    %s107 = sld [smem:[#allocation4 + %s106]]
    %s108 = scalar_lea.vmem [#allocation5], %s107
    %v109 = vld [vmem:[%s108] sm:$0x1]
    %110 = vst [vmem:[#allocation8 + $0xc] sm:$0x1] %v109
    %s111 = sadd.s32 %s46, 13
    %s112 = sld [smem:[#allocation4 + %s111]]
    %s113 = scalar_lea.vmem [#allocation5], %s112
    %v114 = vld [vmem:[%s113] sm:$0x1]
    %115 = vst [vmem:[#allocation8 + $0xd] sm:$0x1] %v114
    %s116 = sadd.s32 %s46, 14
    %s117 = sld [smem:[#allocation4 + %s116]]
    %s118 = scalar_lea.vmem [#allocation5], %s117
    %v119 = vld [vmem:[%s118] sm:$0x1]
    %120 = vst [vmem:[#allocation8 + $0xe] sm:$0x1] %v119
    %s121 = sadd.s32 %s46, 15
    %s122 = sld [smem:[#allocation4 + %s121]]
    %s123 = scalar_lea.vmem [#allocation5], %s122
    %v124 = vld [vmem:[%s123] sm:$0x1]
    %125 = vst [vmem:[#allocation8 + $0xf] sm:$0x1] %v124
    %v126 = vld [vmem:[#allocation2] sm:$0x1]
    %v127 = vld [vmem:[#allocation8] sm:$0xff]
    %v128 = vld [vmem:[#allocation8 + $0x8] sm:$0xff]
    %v129 = vld [vmem:[%s1] sm:$0xff]
    %v130 = vld [vmem:[%s1 + $0x8] sm:$0xff]
    %v131 = vlaneseq
    %v132 = vand.u32 %v131, 127
    %133 = vmax.xlane.f32.xlu0 %v127
    %v134 = vpop.xlane.xlu0 %133
    %135 = vmax.xlane.f32.xlu0 %v128
    %v136 = vpop.xlane.xlu0 %135
    %v137 = vsub.f32 %v127, %v134
    %v138 = vsub.f32 %v128, %v136
    %v139 = vmul.f32 %v137, 1.442695
    %v140 = vpow.pop %v139
    %v141 = vmul.f32 %v138, 1.442695
    %v142 = vpow.pop %v141
    %143 = vadd.xlane.f32.xlu0 %v140
    %v144 = vpop.xlane.xlu0 %143
    %145 = vadd.xlane.f32.xlu0 %v142
    %v146 = vpop.xlane.xlu0 %145
    %v147 = vlog2.pop %v144
    %v148 = vmul.f32 %v147, 0.6931472
    %v149 = vlog2.pop %v146
    %v150 = vmul.f32 %v149, 0.6931472
    %151 = vset.pattern.permute.xlu0 0
    %152 = vperm.xlu0 %151, %v129
    %v153 = vpop.permute.xlu0 %152
    %154 = vset.pattern.permute.xlu0 0
    %155 = vperm.xlu0 %154, %v130
    %v156 = vpop.permute.xlu0 %155
    %vm157 = vcmp.eq.s32.totalorder %v132, %v153
    %vm158 = vcmp.eq.s32.totalorder %v132, %v156
    %v159 = vsel %vm157, %v137, 0.0
    %v160 = vsel %vm158, %v138, 0.0
    %161 = vadd.xlane.f32.xlu0 %v159
    %v162 = vpop.xlane.xlu0 %161
    %163 = vadd.xlane.f32.xlu0 %v160
    %v164 = vpop.xlane.xlu0 %163
    %v165 = vsub.f32 %v148, %v162
    %v166 = vsub.f32 %v150, %v164
    %v167 = vlaneseq
    %v168 = vshrl.u32 %v167, 7
    %v169 = vadd.s32 %v168, 8
    %v170 = vstv %s46
    %v171 = vadd.s32 %v170, %v168
    %v172 = vadd.s32 %v170, %v169
    %vm173 = vcmp.lt.s32.totalorder %v171, 16
    %vm174 = vcmp.lt.s32.totalorder %v172, 16
    %v175 = vsel %vm173, %v165, 0.0
    %v176 = vsel %vm174, %v166, 0.0
    %v177 = vadd.f32 %v175, %v176
    %v178 = vrot.slane %v177, 4
    %v179 = vadd.f32 %v177, %v178
    %v180 = vrot.slane %v179, 2
    %v181 = vadd.f32 %v179, %v180
    %v182 = vrot.slane %v181, 1
    %v183 = vadd.f32 %v181, %v182
    %v184 = vadd.f32 %v126, %v183
    %vm185 = vcmask 0
    %186 = vst.msk [vmem:[#allocation2] sm:$0x1] %vm185, %v184
    // Predicated region
    $region18: #{tpu_custom_call.1} parent=1 // pred_check
      %p187 = pneg %p40
    $region19: #{tpu_custom_call.1} parent=1 // pred_check_branch
      %189 = sbr.rel (%p187) target = $region21
    $region20: #{tpu_custom_call.1} parent=1 // pred_region
      %v190 = vld [vmem:[#allocation2] sm:$0x1]
      %v191 = vmul.f32 %v190, 0.0625
      %192 = vst.msk [vmem:[#allocation9] sm:$0x1] %vm185, %v191
    $region21: #{tpu_custom_call.1} parent=1 // pred_fallthru
      _
    // Predicated region
    $region22: #{tpu_custom_call.1} parent=1 // pred_check
      _
    $region23: #{tpu_custom_call.1} parent=1 // pred_check_branch
      %194 = sbr.rel (0) target = $region25
    $region24: #{tpu_custom_call.1} parent=1 // pred_region
      %196 = vsyncadd [#allocation7], 0
      %s197 = sshll.u32 [#allocation8], 4
      %s198 = int_to_ptr.vmem [resolvable:$true] %s197
      %s199 = sshll.u32 %s3, 4
      %s200 = int_to_ptr.hbm [resolvable:$true] %s199
      %205 = dma.vmem_to_hbm [thread:$0]  %s198, 256, %s200, [#allocation7], 128, 128, 8
    $region25: #{tpu_custom_call.1} parent=1 // pred_fallthru
      _
    // Predicated region
    $region26: #{tpu_custom_call.1} parent=1 // pred_check
      _
    $region27: #{tpu_custom_call.1} parent=1 // pred_check_branch
      %207 = sbr.rel (0) target = $region29
    $region28: #{tpu_custom_call.1} parent=1 // pred_region
      %209 = vsyncadd [#allocation10], 0
      %s211 = sshll.u32 [#allocation9], 4
      %s212 = int_to_ptr.vmem [resolvable:$true] %s211
      %s213 = sshll.u32 %s4, 4
      %s214 = int_to_ptr.hbm [resolvable:$true] %s213
      %216 = dma.vmem_to_hbm [thread:$0]  %s212, 16, %s214, [#allocation10]
    $region29: #{tpu_custom_call.1} parent=1 // pred_fallthru
      _
    // Predicated region
    $region30: #{tpu_custom_call.1} parent=1 // pred_check
      _
    $region31: #{tpu_custom_call.1} parent=1 // pred_check_branch
      %218 = sbr.rel (0) target = $region33
    $region32: #{tpu_custom_call.1} parent=1 // pred_region
      %220 = dma.done [#allocation7], 256
    $region33: #{tpu_custom_call.1} parent=1 // pred_fallthru
      _
    // Predicated region
    $region34: #{tpu_custom_call.1} parent=1 // pred_check
      _
    $region35: #{tpu_custom_call.1} parent=1 // pred_check_branch
      %222 = sbr.rel (0) target = $region37
    $region36: #{tpu_custom_call.1} parent=1 // pred_region
      %224 = dma.done [#allocation10], 16
    $region37: #{tpu_custom_call.1} parent=1 // pred_fallthru
      _
    %225 = vsyncpa [#allocation6], 1
    %226 = vsyncpa [#allocation7], 1
    %227 = vsyncpa [#allocation10], 1

</llo_original>
